<compile_context>
chip_gen: v7x
topology: tpu7x:2x2x1
jax: 0.10.0
libtpu: 0.0.40
codegen_flags: <defaults>
</compile_context>

<pallas_src>
import functools

import jax
import jax.numpy as jnp
from jax import lax
from jax.experimental import pallas as pl
from jax.experimental.pallas import tpu as pltpu


def textclf_kernel(starts_ref, ends_ref, text_ref, emb_ref, w_ref, b_ref,
                   out_ref, acc_ref, mask_ref):
    vi = pl.program_id(1)                      # vocab-tile index (reduction)
    n_vocab_tiles = pl.num_programs(1)
    bag_tile, seq_len = mask_ref.shape
    vocab_tile = emb_ref.shape[0]

    @pl.when(vi == 0)
    def _():
        acc_ref[...] = jnp.zeros_like(acc_ref)
        # Bag-membership mask, built ONCE per bag tile and reused for every
        # vocab tile: token position i belongs to bag b iff
        # starts[b] <= i < ends[b].  Padding positions (>= n_tokens) match none.
        starts = starts_ref[...]               # (bag_tile, 1) int32
        ends = ends_ref[...]                   # (bag_tile, 1) int32
        pos = lax.broadcasted_iota(jnp.int32, (bag_tile, seq_len), 1)
        mask_ref[...] = jnp.logical_and(pos >= starts,
                                        pos < ends).astype(jnp.bfloat16)

    # Transposed token one-hot for this vocab tile: (vocab_tile, seq_len).
    # Only the (1, seq) token row is shifted by the tile offset; the sublane
    # iota is vi-independent.  Padded token ids are -1 -> never match.
    local_ids = text_ref[...] - vi * vocab_tile               # (1, seq) int32
    vid = lax.broadcasted_iota(jnp.int32, (vocab_tile, 1), 0)  # (vocab_tile, 1)
    tok_oh_t = (vid == local_ids).astype(jnp.bfloat16)         # (vocab_tile, seq)

    # hist[b, v] = #tokens of bag b equal to vocab id vi*vocab_tile + v.
    # A @ B^T form: contract the shared lane (seq) dim on the MXU, f32 acc.
    hist = lax.dot_general(mask_ref[...], tok_oh_t,
                           (((1,), (1,)), ((), ())),
                           preferred_element_type=jnp.float32)

    # Contract histogram with the bf16 table tile; accumulate in f32.
    # (bf16 counts are exact up to 256 repeats of one id within one bag.)
    acc_ref[...] += jnp.dot(hist.astype(jnp.bfloat16), emb_ref[...],
                            preferred_element_type=jnp.float32)

    @pl.when(vi == n_vocab_tiles - 1)
    def _():
        counts = (ends_ref[...] - starts_ref[...]).astype(jnp.float32)
        inv = jnp.where(counts > 0.0,
                        pl.reciprocal(jnp.maximum(counts, 1.0), approx=False),
                        0.0)                   # approx=True in prod (EUP slot)
        embedded = acc_ref[...] * inv          # mean; empty bags -> exact 0
        out_ref[...] = (jnp.dot(embedded.astype(jnp.bfloat16), w_ref[...],
                                preferred_element_type=jnp.float32)
                        + b_ref[...])


def _round_up(x: int, m: int) -> int:
    return (x + m - 1) // m * m


@functools.partial(jax.jit,
                   static_argnames=("bag_tile_hint", "vocab_tile_hint",
                                    "class_pad"))
def text_classification_forward(text, offsets, emb_table, fc1_w, fc1_b,
                                *, bag_tile_hint=128, vocab_tile_hint=512,
                                class_pad=128):
    """text: (n_tokens,) int flat token stream; offsets: (num_bags,) int."""
    n_tokens = text.shape[0]
    num_bags = offsets.shape[0]
    vocab, embed_dim = emb_table.shape
    num_classes = fc1_w.shape[0]

    # Empty token stream: every bag is empty -> mean embedding is 0 -> bias.
    if n_tokens == 0:
        return jnp.broadcast_to(fc1_b.astype(jnp.float32),
                                (num_bags, num_classes))

    # --- static tiling / padding decisions (shape-only) ----------------------
    bag_align = 16                                  # bf16 sublane packing
    bag_tile = min(bag_tile_hint, _round_up(num_bags, bag_align))
    # v7x has 2 TensorCores: make the 'parallel' bag axis at least 2 tiles
    # when there are enough real bags to split.
    if (num_bags >= 2 * bag_align
            and _round_up(num_bags, bag_tile) // bag_tile < 2):
        bag_tile = _round_up(-(-num_bags // 2), bag_align)
    num_bags_pad = _round_up(num_bags, bag_tile)

    seq_len_pad = _round_up(n_tokens, 128)          # lane dim / MXU K depth
    vocab_tile = min(vocab_tile_hint, _round_up(vocab, 128))
    vocab_pad = _round_up(vocab, vocab_tile)
    n_classes_pad = _round_up(num_classes, class_pad)

    # --- light glue: per-bag [start, end) ranges, padded operands ------------
    offsets = offsets.astype(jnp.int32)
    pad_bags = num_bags_pad - num_bags
    starts = jnp.concatenate(
        [offsets, jnp.full((pad_bags,), n_tokens, jnp.int32)])
    ends = jnp.concatenate(
        [offsets[1:], jnp.array([n_tokens], jnp.int32),
         jnp.full((pad_bags,), n_tokens, jnp.int32)])
    starts_col = starts.reshape(num_bags_pad, 1)
    ends_col = ends.reshape(num_bags_pad, 1)

    # Lane-dense token row (old (seq,1) column lane-padded 128x in VMEM).
    # Padding ids are -1 -> never match any vocab id.
    text_row = jnp.concatenate(
        [text.astype(jnp.int32),
         jnp.full((seq_len_pad - n_tokens,), -1, jnp.int32)]
    ).reshape(1, seq_len_pad)

    emb_bf = jnp.pad(emb_table,
                     ((0, vocab_pad - vocab), (0, 0))).astype(jnp.bfloat16)
    w_bf = jnp.pad(fc1_w.T,
                   ((0, 0), (0, n_classes_pad - num_classes))
                   ).astype(jnp.bfloat16)
    b_row = jnp.pad(fc1_b, (0, n_classes_pad - num_classes)
                    ).astype(jnp.float32).reshape(1, n_classes_pad)

    grid = (num_bags_pad // bag_tile, vocab_pad // vocab_tile)

    out = pl.pallas_call(
        textclf_kernel,
        out_shape=jax.ShapeDtypeStruct((num_bags_pad, n_classes_pad),
                                       jnp.float32),
        grid_spec=pltpu.PrefetchScalarGridSpec(
            num_scalar_prefetch=0,
            grid=grid,
            in_specs=[
                pl.BlockSpec((bag_tile, 1), lambda bi, vi: (bi, 0)),      # starts
                pl.BlockSpec((bag_tile, 1), lambda bi, vi: (bi, 0)),      # ends
                pl.BlockSpec((1, seq_len_pad), lambda bi, vi: (0, 0)),    # tokens
                pl.BlockSpec((vocab_tile, embed_dim),
                             lambda bi, vi: (vi, 0)),                     # table
                pl.BlockSpec((embed_dim, n_classes_pad),
                             lambda bi, vi: (0, 0)),                      # fc1 W^T
                pl.BlockSpec((1, n_classes_pad), lambda bi, vi: (0, 0)),  # fc1 b
            ],
            out_specs=pl.BlockSpec((bag_tile, n_classes_pad),
                                   lambda bi, vi: (bi, 0)),
            scratch_shapes=[
                pltpu.VMEM((bag_tile, embed_dim), jnp.float32),   # bag-sum acc
                pltpu.VMEM((bag_tile, seq_len_pad), jnp.bfloat16),  # hoisted mask
            ]),
        compiler_params=pltpu.CompilerParams(
            dimension_semantics=("parallel", "arbitrary"),
            # Re-derive for very long streams on v7x (64 MiB physical VMEM).
            vmem_limit_bytes=32 * 1024 * 1024),
    )(starts_col, ends_col, text_row, emb_bf, w_bf, b_row)

    return out[:num_bags, :num_classes]


if __name__ == "__main__":
    vocab_size, embed_dim, num_classes = 1000, 128, 8
    key = jax.random.PRNGKey(0)
    k1, k2, k3 = jax.random.split(key, 3)

    # init_weights(): uniform(-0.5, 0.5) for embedding & fc1 weight, zero bias.
    emb_table = jax.random.uniform(k1, (vocab_size, embed_dim),
                                   jnp.float32, -0.5, 0.5)
    fc1_w = jax.random.uniform(k2, (num_classes, embed_dim),
                               jnp.float32, -0.5, 0.5)
    fc1_b = jnp.zeros((num_classes,), jnp.float32)

    # Flat EmbeddingBag input: 23 tokens in 5 bags; bag 1 is deliberately empty.
    text = jax.random.randint(k3, (23,), 0, vocab_size, dtype=jnp.int32)
    offsets = jnp.array([0, 5, 5, 12, 17], dtype=jnp.int32)

    out = text_classification_forward(text, offsets, emb_table, fc1_w, fc1_b)
    out = jax.block_until_ready(out)

    # Pure-JAX reference of the PyTorch forward (EmbeddingBag mean + Linear),
    # using the same bf16-rounded weights the kernel consumes.
    emb_f = emb_table.astype(jnp.bfloat16).astype(jnp.float32)
    w_f = fc1_w.astype(jnp.bfloat16).astype(jnp.float32)
    n_tokens, num_bags = text.shape[0], offsets.shape[0]
    bag_ids = jnp.searchsorted(offsets, jnp.arange(n_tokens), side="right") - 1
    sums = jax.ops.segment_sum(emb_f[text], bag_ids, num_segments=num_bags)
    cnts = jax.ops.segment_sum(jnp.ones((n_tokens, 1)), bag_ids,
                               num_segments=num_bags)
    mean = jnp.where(cnts > 0, sums / jnp.maximum(cnts, 1.0), 0.0)
    ref = mean.astype(jnp.bfloat16).astype(jnp.float32) @ w_f.T + fc1_b

    assert out.shape == (num_bags, num_classes)
    assert bool(jnp.allclose(out, ref, rtol=5e-3, atol=5e-3)), \
        "mismatch vs reference"
    print("KERNEL_OK")
</pallas_src>

<mosaic_0001>
module attributes {stable_mosaic.version = 11 : i64} {
  func.func @textclf_kernel(%arg0: i32, %arg1: i32, %arg2: memref<16x1xi32, #tpu.memory_space<vmem>>, %arg3: memref<16x1xi32, #tpu.memory_space<vmem>>, %arg4: memref<1x128xi32, #tpu.memory_space<vmem>>, %arg5: memref<512x128xbf16, #tpu.memory_space<vmem>>, %arg6: memref<128x128xbf16, #tpu.memory_space<vmem>>, %arg7: memref<1x128xf32, #tpu.memory_space<vmem>>, %arg8: memref<16x128xf32, #tpu.memory_space<vmem>>, %arg9: memref<16x128xf32, #tpu.memory_space<vmem>>, %arg10: memref<16x128xbf16, #tpu.memory_space<vmem>>) attributes {dimension_semantics = [#tpu.dimension_semantics<parallel>, #tpu.dimension_semantics<arbitrary>], iteration_bounds = array<i64: 1, 2>, scalar_prefetch = 0 : i64, scratch_operands = 2 : i64, tpu.core_type = #tpu.core_type<tc>, window_params = [{transform_indices = @transform_0, window_bounds = array<i64: 16, 1>}, {transform_indices = @transform_1, window_bounds = array<i64: 16, 1>}, {pipeline_mode = #tpu.pipeline_mode<synchronous>, transform_indices = @transform_2, window_bounds = array<i64: 1, 128>}, {transform_indices = @transform_3, window_bounds = array<i64: 512, 128>}, {pipeline_mode = #tpu.pipeline_mode<synchronous>, transform_indices = @transform_4, window_bounds = array<i64: 128, 128>}, {pipeline_mode = #tpu.pipeline_mode<synchronous>, transform_indices = @transform_5, window_bounds = array<i64: 1, 128>}, {transform_indices = @transform_6, window_bounds = array<i64: 16, 128>}]} {
    %c0_i32 = arith.constant 0 : i32
    %0 = arith.cmpi eq, %arg1, %c0_i32 : i32
    %1 = arith.extui %0 : i1 to i32
    %c0_i32_0 = arith.constant 0 : i32
    %2 = arith.cmpi ne, %1, %c0_i32_0 : i32
    scf.if %2 {
      %cst_12 = arith.constant 0.000000e+00 : f32
      %25 = vector.broadcast %cst_12 : f32 to vector<16x128xf32>
      %c0_13 = arith.constant 0 : index
      %c0_14 = arith.constant 0 : index
      %26 = vector.load %arg9[%c0_13, %c0_14] : memref<16x128xf32, #tpu.memory_space<vmem>>, vector<16x128xf32>
      tpu.vector_store %arg9[%c0_13, %c0_14], %25 {strides = array<i32>} : memref<16x128xf32, #tpu.memory_space<vmem>>, vector<16x128xf32>,
      %c0_15 = arith.constant 0 : index
      %c0_16 = arith.constant 0 : index
      %27 = vector.load %arg2[%c0_15, %c0_16] : memref<16x1xi32, #tpu.memory_space<vmem>>, vector<16x1xi32>
      %c0_17 = arith.constant 0 : index
      %c0_18 = arith.constant 0 : index
      %28 = vector.load %arg3[%c0_17, %c0_18] : memref<16x1xi32, #tpu.memory_space<vmem>>, vector<16x1xi32>
      %29 = tpu.iota {dimensions = array<i32: 1>} : vector<16x128xi32>
      %30 = vector.broadcast %27 : vector<16x1xi32> to vector<16x128xi32>
      %31 = arith.cmpi sge, %29, %30 : vector<16x128xi32>
      %32 = vector.broadcast %28 : vector<16x1xi32> to vector<16x128xi32>
      %33 = arith.cmpi slt, %29, %32 : vector<16x128xi32>
      %34 = arith.andi %31, %33 : vector<16x128xi1>
      %35 = arith.extui %34 : vector<16x128xi1> to vector<16x128xi32>
      %36 = arith.sitofp %35 : vector<16x128xi32> to vector<16x128xf32>
      %37 = arith.truncf %36 : vector<16x128xf32> to vector<16x128xbf16>
      %c0_19 = arith.constant 0 : index
      %c0_20 = arith.constant 0 : index
      %38 = vector.load %arg10[%c0_19, %c0_20] : memref<16x128xbf16, #tpu.memory_space<vmem>>, vector<16x128xbf16>
      tpu.vector_store %arg10[%c0_19, %c0_20], %37 {strides = array<i32>} : memref<16x128xbf16, #tpu.memory_space<vmem>>, vector<16x128xbf16>,
    } else {
    }
    %c0 = arith.constant 0 : index
    %c0_1 = arith.constant 0 : index
    %3 = vector.load %arg4[%c0, %c0_1] : memref<1x128xi32, #tpu.memory_space<vmem>>, vector<1x128xi32>
    %c512_i32 = arith.constant 512 : i32
    %4 = arith.muli %arg1, %c512_i32 : i32
    %5 = vector.broadcast %4 : i32 to vector<1x128xi32>
    %6 = arith.subi %3, %5 : vector<1x128xi32>
    %7 = tpu.iota {dimensions = array<i32: 0>} : vector<512x1xi32>
    %8 = vector.broadcast %7 : vector<512x1xi32> to vector<512x128xi32>
    %9 = vector.broadcast %6 : vector<1x128xi32> to vector<512x128xi32>
    %10 = arith.cmpi eq, %8, %9 : vector<512x128xi32>
    %11 = arith.extui %10 : vector<512x128xi1> to vector<512x128xi32>
    %12 = arith.sitofp %11 : vector<512x128xi32> to vector<512x128xf32>
    %13 = arith.truncf %12 : vector<512x128xf32> to vector<512x128xbf16>
    %c0_2 = arith.constant 0 : index
    %c0_3 = arith.constant 0 : index
    %14 = vector.load %arg10[%c0_2, %c0_3] : memref<16x128xbf16, #tpu.memory_space<vmem>>, vector<16x128xbf16>
    %cst = arith.constant dense<0.000000e+00> : vector<16x512xf32>
    %15 = tpu.matmul %14, %13, %cst {dimension_numbers = #tpu.dot_dimension_numbers<[1], [1], [0], [0], [0, 0, 1, 0], [], []>} : vector<16x128xbf16>, vector<512x128xbf16>, vector<16x512xf32> -> vector<16x512xf32>
    %c0_4 = arith.constant 0 : index
    %c0_5 = arith.constant 0 : index
    %16 = vector.load %arg9[%c0_4, %c0_5] : memref<16x128xf32, #tpu.memory_space<vmem>>, vector<16x128xf32>
    %17 = arith.truncf %15 : vector<16x512xf32> to vector<16x512xbf16>
    %c0_6 = arith.constant 0 : index
    %c0_7 = arith.constant 0 : index
    %18 = vector.load %arg5[%c0_6, %c0_7] : memref<512x128xbf16, #tpu.memory_space<vmem>>, vector<512x128xbf16>
    %cst_8 = arith.constant dense<0.000000e+00> : vector<16x128xf32>
    %19 = tpu.matmul %17, %18, %cst_8 {dimension_numbers = #tpu.dot_dimension_numbers<[1], [0], [0], [1], [0, 0, 1, 1], [], []>} : vector<16x512xbf16>, vector<512x128xbf16>, vector<16x128xf32> -> vector<16x128xf32>
    %20 = arith.addf %16, %19 : vector<16x128xf32>
    %c0_9 = arith.constant 0 : index
    %c0_10 = arith.constant 0 : index
    %21 = vector.load %arg9[%c0_9, %c0_10] : memref<16x128xf32, #tpu.memory_space<vmem>>, vector<16x128xf32>
    tpu.vector_store %arg9[%c0_9, %c0_10], %20 {strides = array<i32>} : memref<16x128xf32, #tpu.memory_space<vmem>>, vector<16x128xf32>,
    %c1_i32 = arith.constant 1 : i32
    %22 = arith.cmpi eq, %arg1, %c1_i32 : i32
    %23 = arith.extui %22 : i1 to i32
    %c0_i32_11 = arith.constant 0 : i32
    %24 = arith.cmpi ne, %23, %c0_i32_11 : i32
    scf.if %24 {
      %c0_12 = arith.constant 0 : index
      %c0_13 = arith.constant 0 : index
      %25 = vector.load %arg3[%c0_12, %c0_13] : memref<16x1xi32, #tpu.memory_space<vmem>>, vector<16x1xi32>
      %c0_14 = arith.constant 0 : index
      %c0_15 = arith.constant 0 : index
      %26 = vector.load %arg2[%c0_14, %c0_15] : memref<16x1xi32, #tpu.memory_space<vmem>>, vector<16x1xi32>
      %27 = arith.subi %25, %26 : vector<16x1xi32>
      %28 = arith.sitofp %27 : vector<16x1xi32> to vector<16x1xf32>
      %cst_16 = arith.constant 0.000000e+00 : f32
      %29 = vector.broadcast %cst_16 : f32 to vector<16x1xf32>
      %30 = arith.cmpf ogt, %28, %29 : vector<16x1xf32>
      %cst_17 = arith.constant 1.000000e+00 : f32
      %31 = vector.broadcast %cst_17 : f32 to vector<16x1xf32>
      %32 = arith.maximumf %28, %31 : vector<16x1xf32>
      %33 = tpu.reciprocal %32 : vector<16x1xf32> -> vector<16x1xf32>
      %cst_18 = arith.constant 0.000000e+00 : f32
      %34 = vector.broadcast %cst_18 : f32 to vector<16x1xf32>
      %35 = arith.select %30, %33, %34 : vector<16x1xi1>, vector<16x1xf32>
      %c0_19 = arith.constant 0 : index
      %c0_20 = arith.constant 0 : index
      %36 = vector.load %arg9[%c0_19, %c0_20] : memref<16x128xf32, #tpu.memory_space<vmem>>, vector<16x128xf32>
      %37 = vector.broadcast %35 : vector<16x1xf32> to vector<16x128xf32>
      %38 = arith.mulf %36, %37 : vector<16x128xf32>
      %39 = arith.truncf %38 : vector<16x128xf32> to vector<16x128xbf16>
      %c0_21 = arith.constant 0 : index
      %c0_22 = arith.constant 0 : index
      %40 = vector.load %arg6[%c0_21, %c0_22] : memref<128x128xbf16, #tpu.memory_space<vmem>>, vector<128x128xbf16>
      %cst_23 = arith.constant dense<0.000000e+00> : vector<16x128xf32>
      %41 = tpu.matmul %39, %40, %cst_23 {dimension_numbers = #tpu.dot_dimension_numbers<[1], [0], [0], [1], [0, 0, 1, 1], [], []>} : vector<16x128xbf16>, vector<128x128xbf16>, vector<16x128xf32> -> vector<16x128xf32>
      %c0_24 = arith.constant 0 : index
      %c0_25 = arith.constant 0 : index
      %42 = vector.load %arg7[%c0_24, %c0_25] : memref<1x128xf32, #tpu.memory_space<vmem>>, vector<1x128xf32>
      %43 = vector.broadcast %42 : vector<1x128xf32> to vector<16x128xf32>
      %44 = arith.addf %41, %43 : vector<16x128xf32>
      %c0_26 = arith.constant 0 : index
      %c0_27 = arith.constant 0 : index
      %45 = vector.load %arg8[%c0_26, %c0_27] : memref<16x128xf32, #tpu.memory_space<vmem>>, vector<16x128xf32>
      tpu.vector_store %arg8[%c0_26, %c0_27], %44 {strides = array<i32>} : memref<16x128xf32, #tpu.memory_space<vmem>>, vector<16x128xf32>,
    } else {
    }
    return
  }
  func.func @transform_0(%arg0: i32, %arg1: i32) -> (i32, i32) {
    %c0_i32 = arith.constant 0 : i32
    %c0_i32_0 = arith.constant 0 : i32
    return %arg0, %c0_i32 : i32, i32
  }
  func.func @transform_1(%arg0: i32, %arg1: i32) -> (i32, i32) {
    %c0_i32 = arith.constant 0 : i32
    %c0_i32_0 = arith.constant 0 : i32
    return %arg0, %c0_i32 : i32, i32
  }
  func.func @transform_2(%arg0: i32, %arg1: i32) -> (i32, i32) {
    %c0_i32 = arith.constant 0 : i32
    %c0_i32_0 = arith.constant 0 : i32
    %c0_i32_1 = arith.constant 0 : i32
    return %c0_i32, %c0_i32_0 : i32, i32
  }
  func.func @transform_3(%arg0: i32, %arg1: i32) -> (i32, i32) {
    %c0_i32 = arith.constant 0 : i32
    %c0_i32_0 = arith.constant 0 : i32
    return %arg1, %c0_i32 : i32, i32
  }
  func.func @transform_4(%arg0: i32, %arg1: i32) -> (i32, i32) {
    %c0_i32 = arith.constant 0 : i32
    %c0_i32_0 = arith.constant 0 : i32
    %c0_i32_1 = arith.constant 0 : i32
    return %c0_i32, %c0_i32_0 : i32, i32
  }
  func.func @transform_5(%arg0: i32, %arg1: i32) -> (i32, i32) {
    %c0_i32 = arith.constant 0 : i32
    %c0_i32_0 = arith.constant 0 : i32
    %c0_i32_1 = arith.constant 0 : i32
    return %c0_i32, %c0_i32_0 : i32, i32
  }
  func.func @transform_6(%arg0: i32, %arg1: i32) -> (i32, i32) {
    %c0_i32 = arith.constant 0 : i32
    %c0_i32_0 = arith.constant 0 : i32
    return %arg0, %c0_i32 : i32, i32
  }
}

</mosaic_0001>

<llo_original>
// kernel: text_classification_forward.1
$region0: #{text_classification_forward.1}
  #allocation0 [shape = 'u32[]', space=smem, size = 0x4, offset = 0x4, fixed_abs, tag = 'smem constant byte address 0x4 - core index']
  #allocation1 [shape = 'u32[144,128]{1,0:T(1,128)}', space=vmem, size = 0x12000, scoped, tag = 'internal scratch']
  #allocation2 [shape = 'f32[16,128]{1,0:T(8,128)}', space=vmem, size = 0x2000, scoped, tag = 'scratch operand']
  #allocation3 [shape = 'bf16[16,128]{1,0:T(16,128)(2,1)}', space=vmem, size = 0x1000, scoped, tag = 'scratch operand']
  %s0 = inlined_call_operand.vmem [shape: s32[16,1], index: 0, kind: input, shape index: {}]
  %s1 = inlined_call_operand.vmem [shape: s32[16,1], index: 1, kind: input, shape index: {}]
  %s2 = inlined_call_operand.vmem [shape: s32[1,128], index: 2, kind: input, shape index: {}]
  %s3 = inlined_call_operand.vmem [shape: bf16[1024,128], index: 3, kind: input, shape index: {}]
  %s4 = inlined_call_operand.vmem [shape: bf16[128,128], index: 4, kind: input, shape index: {}]
  %s5 = inlined_call_operand.vmem [shape: f32[1,128], index: 5, kind: input, shape index: {}]
  %s6 = inlined_call_operand.vmem [shape: f32[16,128], index: 6, kind: output, shape index: {}]
  %s7 = sld [smem:[#allocation0]]
  $region65: #{text_classification_forward.1} parent=0
    _
  %s9 = ssub.s32 1, %s7
  %s10 = scalar_select 0, %s9, %s7
  loop: start=0, step=1, limit=4
  $region2: #{text_classification_forward.1} parent=0 // loop_pre_header
    _
  $region3: #{text_classification_forward.1} parent=0 // loop_header
    %s12 = sphi 0, %s16
    %p13 = scmp.ge.s32.totalorder %s12, 4
    %s19 = sphi 0, %s31
    %s20 = sphi 0, %s27
    %s21 = sphi 0, %s19
    %s22 = sphi 0, %s20
    %s23 = sphi 0, %s21
    %s24 = sphi 0, %s22
    %s34 = sphi 0, %s36
    %s37 = sphi 0, %s34
    %s38 = sphi 0, %s37
    %s54 = sphi 0, %s38
    %s60 = sphi 0, %s62
    %s63 = sphi 0, %s60
    %s64 = sphi 0, %s63
    %s80 = sphi 0, %s64
    %s84 = sphi 0, %s84
    %s86 = sphi 0, %s84
    %s87 = sphi 0, %s86
    %s101 = sphi 0, %s87
    %s107 = sphi 0, %s109
    %s110 = sphi 0, %s107
    %s111 = sphi 0, %s110
    %s127 = sphi 0, %s111
    %s131 = sphi 0, %s131
    %s133 = sphi 0, %s131
    %s134 = sphi 0, %s133
    %s148 = sphi 0, %s134
    %s152 = sphi 0, %s152
    %s154 = sphi 0, %s152
    %s155 = sphi 0, %s154
    %s169 = sphi 0, %s155
    %s175 = sphi 0, %s177
    %s178 = sphi 0, %s175
    %s179 = sphi 0, %s178
    %s195 = sphi 0, %s179
  $region4: #{text_classification_forward.1} parent=0 // loop_header_branch
    %15 = sbr.rel (%p13) target = $region8
  $region5: #{text_classification_forward.1} parent=0 // loop_body
    %s17 = ssub.s32 %s12, 1
    %s18 = ssub.s32 %s12, 2
    %s25 = sadd.s32 1, %s20
    %p26 = scmp.ge.s32.totalorder %s25, 2
    %s27 = scalar_select %p26, 0, %s25
    %s28 = sadd.s32 1, %s19
    %s29 = scalar_select %p26, %s28, %s19
    %p30 = scmp.ge.s32.totalorder %s29, 1
    %s31 = scalar_select %p30, 0, %s29
    %s32 = ssub.s32 %s19, %s31
    %p33 = scmp.eq.s32.totalorder %s32, 0
    %s35 = sadd.s32 %s34, 1
    %s36 = scalar_select %p33, %s34, %s35
    %p39 = pneg %p33
    %p40 = scmp.eq.s32.totalorder %s12, 1
    %p41 = por %p39, %p40
    %p42 = scmp.ne.s32.totalorder %s34, %s37
    %p43 = scmp.eq.s32.totalorder %s12, 0
    %p44 = por %p42, %p43
    %p45 = scmp.ne.s32.totalorder %s34, %s37
    %p46 = scmp.eq.s32.totalorder %s17, 1
    %p47 = por %p45, %p46
    %p48 = scmp.ne.s32.totalorder %s37, %s38
    %p49 = scmp.eq.s32.totalorder %s17, 0
    %p50 = por %p48, %p49
    %p51 = scmp.ne.s32.totalorder %s37, %s38
    %p52 = scmp.eq.s32.totalorder %s18, 1
    %p53 = por %p51, %p52
    %p55 = scmp.ne.s32.totalorder %s38, %s54
    %p56 = scmp.eq.s32.totalorder %s18, 0
    %p57 = por %p55, %p56
    %s58 = ssub.s32 %s19, %s31
    %p59 = scmp.eq.s32.totalorder %s58, 0
    %s61 = sadd.s32 %s60, 1
    %s62 = scalar_select %p59, %s60, %s61
    %p65 = pneg %p59
    %p66 = scmp.eq.s32.totalorder %s12, 1
    %p67 = por %p65, %p66
    %p68 = scmp.ne.s32.totalorder %s60, %s63
    %p69 = scmp.eq.s32.totalorder %s12, 0
    %p70 = por %p68, %p69
    %p71 = scmp.ne.s32.totalorder %s60, %s63
    %p72 = scmp.eq.s32.totalorder %s17, 1
    %p73 = por %p71, %p72
    %p74 = scmp.ne.s32.totalorder %s63, %s64
    %p75 = scmp.eq.s32.totalorder %s17, 0
    %p76 = por %p74, %p75
    %p77 = scmp.ne.s32.totalorder %s63, %s64
    %p78 = scmp.eq.s32.totalorder %s18, 1
    %p79 = por %p77, %p78
    %p81 = scmp.ne.s32.totalorder %s64, %s80
    %p82 = scmp.eq.s32.totalorder %s18, 0
    %p83 = por %p81, %p82
    %s85 = sadd.s32 %s84, 1
    %p88 = scmp.eq.s32.totalorder %s12, 1
    %p89 = scmp.ne.s32.totalorder %s84, %s86
    %p90 = scmp.eq.s32.totalorder %s12, 0
    %p91 = por %p89, %p90
    %p92 = scmp.ne.s32.totalorder %s84, %s86
    %p93 = scmp.eq.s32.totalorder %s17, 1
    %p94 = por %p92, %p93
    %p95 = scmp.ne.s32.totalorder %s86, %s87
    %p96 = scmp.eq.s32.totalorder %s17, 0
    %p97 = por %p95, %p96
    %p98 = scmp.ne.s32.totalorder %s86, %s87
    %p99 = scmp.eq.s32.totalorder %s18, 1
    %p100 = por %p98, %p99
    %p102 = scmp.ne.s32.totalorder %s87, %s101
    %p103 = scmp.eq.s32.totalorder %s18, 0
    %p104 = por %p102, %p103
    %s105 = ssub.s32 %s20, %s27
    %p106 = scmp.eq.s32.totalorder %s105, 0
    %s108 = sadd.s32 %s107, 1
    %s109 = scalar_select %p106, %s107, %s108
    %p112 = pneg %p106
    %p113 = scmp.eq.s32.totalorder %s12, 1
    %p114 = por %p112, %p113
    %p115 = scmp.ne.s32.totalorder %s107, %s110
    %p116 = scmp.eq.s32.totalorder %s12, 0
    %p117 = por %p115, %p116
    %p118 = scmp.ne.s32.totalorder %s107, %s110
    %p119 = scmp.eq.s32.totalorder %s17, 1
    %p120 = por %p118, %p119
    %p121 = scmp.ne.s32.totalorder %s110, %s111
    %p122 = scmp.eq.s32.totalorder %s17, 0
    %p123 = por %p121, %p122
    %p124 = scmp.ne.s32.totalorder %s110, %s111
    %p125 = scmp.eq.s32.totalorder %s18, 1
    %p126 = por %p124, %p125
    %p128 = scmp.ne.s32.totalorder %s111, %s127
    %p129 = scmp.eq.s32.totalorder %s18, 0
    %p130 = por %p128, %p129
    %s132 = sadd.s32 %s131, 1
    %p135 = scmp.eq.s32.totalorder %s12, 1
    %p136 = scmp.ne.s32.totalorder %s131, %s133
    %p137 = scmp.eq.s32.totalorder %s12, 0
    %p138 = por %p136, %p137
    %p139 = scmp.ne.s32.totalorder %s131, %s133
    %p140 = scmp.eq.s32.totalorder %s17, 1
    %p141 = por %p139, %p140
    %p142 = scmp.ne.s32.totalorder %s133, %s134
    %p143 = scmp.eq.s32.totalorder %s17, 0
    %p144 = por %p142, %p143
    %p145 = scmp.ne.s32.totalorder %s133, %s134
    %p146 = scmp.eq.s32.totalorder %s18, 1
    %p147 = por %p145, %p146
    %p149 = scmp.ne.s32.totalorder %s134, %s148
    %p150 = scmp.eq.s32.totalorder %s18, 0
    %p151 = por %p149, %p150
    %s153 = sadd.s32 %s152, 1
    %p156 = scmp.eq.s32.totalorder %s12, 1
    %p157 = scmp.ne.s32.totalorder %s152, %s154
    %p158 = scmp.eq.s32.totalorder %s12, 0
    %p159 = por %p157, %p158
    %p160 = scmp.ne.s32.totalorder %s152, %s154
    %p161 = scmp.eq.s32.totalorder %s17, 1
    %p162 = por %p160, %p161
    %p163 = scmp.ne.s32.totalorder %s154, %s155
    %p164 = scmp.eq.s32.totalorder %s17, 0
    %p165 = por %p163, %p164
    %p166 = scmp.ne.s32.totalorder %s154, %s155
    %p167 = scmp.eq.s32.totalorder %s18, 1
    %p168 = por %p166, %p167
    %p170 = scmp.ne.s32.totalorder %s155, %s169
    %p171 = scmp.eq.s32.totalorder %s18, 0
    %p172 = por %p170, %p171
    %s173 = ssub.s32 %s19, %s31
    %p174 = scmp.eq.s32.totalorder %s173, 0
    %s176 = sadd.s32 %s175, 1
    %s177 = scalar_select %p174, %s175, %s176
    %p180 = pneg %p174
    %p181 = scmp.eq.s32.totalorder %s12, 1
    %p182 = por %p180, %p181
    %p183 = scmp.ne.s32.totalorder %s175, %s178
    %p184 = scmp.eq.s32.totalorder %s12, 0
    %p185 = por %p183, %p184
    %p186 = scmp.ne.s32.totalorder %s175, %s178
    %p187 = scmp.eq.s32.totalorder %s17, 1
    %p188 = por %p186, %p187
    %p189 = scmp.ne.s32.totalorder %s178, %s179
    %p190 = scmp.eq.s32.totalorder %s17, 0
    %p191 = por %p189, %p190
    %p192 = scmp.ne.s32.totalorder %s178, %s179
    %p193 = scmp.eq.s32.totalorder %s18, 1
    %p194 = por %p192, %p193
    %p196 = scmp.ne.s32.totalorder %s179, %s195
    %p197 = scmp.eq.s32.totalorder %s18, 0
    %p198 = por %p196, %p197
    %p199 = scmp.le.s32.totalorder 1, %s12
    %p200 = scmp.lt.s32.totalorder %s12, 3
    %p201 = pnand %p199, %p200
    %p202 = pneg %p201
    // Predicated region
    $region9: #{text_classification_forward.1} parent=5 // pred_check
      _
    $region10: #{text_classification_forward.1} parent=5 // pred_check_branch
      %204 = sbr.rel (%p201) target = $region12
    $region11: #{text_classification_forward.1} parent=5 // pred_region
      %s205 = ssub.s32 %s12, 1
      // Predicated region
      $region13: #{text_classification_forward.1} parent=11 // pred_check
        %p206 = pneg %p50
      $region14: #{text_classification_forward.1} parent=11 // pred_check_branch
        %208 = sbr.rel (%p206) target = $region16
      $region15: #{text_classification_forward.1} parent=11 // pred_region
        %s209 = smul.u32 2, %s21
        %p210 = scmp.lt.s32.totalorder %s209, 1
        %s211 = scalar_select %p210, %s209, 1
        %s212 = smul.addr %s211, 8
        %s213 = scalar_lea.vmem %s0, %s212
        %s214 = smul.u32 2, %s21
      $region16: #{text_classification_forward.1} parent=11 // pred_fallthru
        _
      // Predicated region
      $region17: #{text_classification_forward.1} parent=11 // pred_check
        %p215 = pneg %p76
      $region18: #{text_classification_forward.1} parent=11 // pred_check_branch
        %217 = sbr.rel (%p215) target = $region20
      $region19: #{text_classification_forward.1} parent=11 // pred_region
        %s218 = smul.u32 2, %s21
        %p219 = scmp.lt.s32.totalorder %s218, 1
        %s220 = scalar_select %p219, %s218, 1
        %s221 = smul.addr %s220, 8
        %s222 = scalar_lea.vmem %s1, %s221
        %s223 = smul.u32 2, %s21
      $region20: #{text_classification_forward.1} parent=11 // pred_fallthru
        _
      // Predicated region
      $region21: #{text_classification_forward.1} parent=11 // pred_check
        %p224 = pneg %p97
      $region22: #{text_classification_forward.1} parent=11 // pred_check_branch
        %226 = sbr.rel (%p224) target = $region24
      $region23: #{text_classification_forward.1} parent=11 // pred_region
        _
      $region24: #{text_classification_forward.1} parent=11 // pred_fallthru
        _
      // Predicated region
      $region25: #{text_classification_forward.1} parent=11 // pred_check
        %p227 = pneg %p144
      $region26: #{text_classification_forward.1} parent=11 // pred_check_branch
        %229 = sbr.rel (%p227) target = $region28
      $region27: #{text_classification_forward.1} parent=11 // pred_region
        _
      $region28: #{text_classification_forward.1} parent=11 // pred_fallthru
        _
      // Predicated region
      $region29: #{text_classification_forward.1} parent=11 // pred_check
        %p230 = pneg %p165
      $region30: #{text_classification_forward.1} parent=11 // pred_check_branch
        %232 = sbr.rel (%p230) target = $region32
      $region31: #{text_classification_forward.1} parent=11 // pred_region
        _
      $region32: #{text_classification_forward.1} parent=11 // pred_fallthru
        _
    $region12: #{text_classification_forward.1} parent=5 // pred_fallthru
      _
    %p233 = scmp.lt.s32.totalorder %s12, 2
    // Predicated region
    $region33: #{text_classification_forward.1} parent=5 // pred_check
      %p234 = pneg %p233
    $region34: #{text_classification_forward.1} parent=5 // pred_check_branch
      %236 = sbr.rel (%p234) target = $region36
    $region35: #{text_classification_forward.1} parent=5 // pred_region
      // Predicated region
      $region37: #{text_classification_forward.1} parent=35 // pred_check
        %p237 = pneg %p117
      $region38: #{text_classification_forward.1} parent=35 // pred_check_branch
        %239 = sbr.rel (%p237) target = $region40
      $region39: #{text_classification_forward.1} parent=35 // pred_region
        %s240 = smul.u32 64, %s20
        %p241 = scmp.lt.s32.totalorder %s240, 127
        %s242 = scalar_select %p241, %s240, 127
        %s243 = smul.addr %s242, 4
        %s244 = scalar_lea.vmem %s3, %s243
        %s245 = smul.u32 64, %s20
      $region40: #{text_classification_forward.1} parent=35 // pred_fallthru
        _
    $region36: #{text_classification_forward.1} parent=5 // pred_fallthru
      _
    %p246 = scmp.le.s32.totalorder 1, %s12
    %p247 = scmp.lt.s32.totalorder %s12, 3
    %p248 = pnand %p246, %p247
    %p249 = pneg %p248
    // Predicated region
    $region41: #{text_classification_forward.1} parent=5 // pred_check
      _
    $region42: #{text_classification_forward.1} parent=5 // pred_check_branch
      %251 = sbr.rel (%p248) target = $region44
    $region43: #{text_classification_forward.1} parent=5 // pred_region
      %s252 = ssub.s32 %s12, 1
      %s253 = smul.u32 2, %s21
      %p254 = scmp.lt.s32.totalorder %s253, 1
      %s255 = scalar_select %p254, %s253, 1
      %s256 = smul.addr %s255, 8
      %s257 = scalar_lea.vmem %s0, %s256
      %p258 = pneg %p50
      %p259 = pneg %p47
      %s260 = smul.u32 2, %s21
      %p261 = scmp.lt.s32.totalorder %s260, 1
      %s262 = scalar_select %p261, %s260, 1
      %s263 = smul.addr %s262, 8
      %s264 = scalar_lea.vmem %s1, %s263
      %p265 = pneg %p76
      %p266 = pneg %p73
      %p267 = pneg %p97
      %p268 = pneg %p94
      %s269 = smul.u32 64, %s22
      %p270 = scmp.lt.s32.totalorder %s269, 127
      %s271 = scalar_select %p270, %s269, 127
      %s272 = smul.addr %s271, 4
      %s273 = scalar_lea.vmem %s3, %s272
      %p274 = pneg %p123
      %p275 = pneg %p120
      %p276 = pneg %p144
      %p277 = pneg %p141
      %p278 = pneg %p165
      %p279 = pneg %p162
      %p280 = pneg %p191
      %p281 = pneg %p188
      %s282 = smul.u32 2, %s21
      %p283 = scmp.lt.s32.totalorder %s282, 1
      %s284 = scalar_select %p283, %s282, 1
      %s285 = smul.addr %s284, 8
      %s286 = scalar_lea.vmem %s6, %s285
      %s287 = smul.u32 2, %s21
      %p288 = scmp.lt.s32.totalorder %s287, 1
      %s289 = scalar_select %p288, %s287, 1
      %s290 = smul.addr %s289, 8
      %s291 = scalar_lea.vmem %s0, %s290
      %s292 = smul.u32 2, %s21
      %s293 = smul.u32 2, %s21
      %p294 = scmp.lt.s32.totalorder %s293, 1
      %s295 = scalar_select %p294, %s293, 1
      %s296 = smul.addr %s295, 8
      %s297 = scalar_lea.vmem %s1, %s296
      %s298 = smul.u32 2, %s21
      %s299 = smul.u32 64, %s22
      %p300 = scmp.lt.s32.totalorder %s299, 127
      %s301 = scalar_select %p300, %s299, 127
      %s302 = smul.addr %s301, 4
      %s303 = scalar_lea.vmem %s3, %s302
      %s304 = smul.u32 64, %s22
      %s305 = smul.u32 2, %s21
      %p306 = scmp.lt.s32.totalorder %s305, 1
      %s307 = scalar_select %p306, %s305, 1
      %s308 = smul.addr %s307, 8
      %s309 = scalar_lea.vmem %s6, %s308
      %s310 = smul.u32 2, %s21
      %p312 = scmp.eq.s32.totalorder %s22, 0
      // Predicated region
      $region45: #{text_classification_forward.1} parent=43 // pred_check
        %p313 = pneg %p312
      $region46: #{text_classification_forward.1} parent=43 // pred_check_branch
        %315 = sbr.rel (%p313) target = $region48
      $region47: #{text_classification_forward.1} parent=43 // pred_region
        %316 = vst [vmem:[#allocation2] sm:$0xff] 0.0
        %317 = vst [vmem:[#allocation2 + $0x8] sm:$0xff] 0.0
        %v318 = vld [vmem:[%s291] sm:$0xff]
        %v319 = vld [vmem:[%s291 + $0x8] sm:$0xff]
        %v320 = vld [vmem:[%s297] sm:$0xff]
        %v321 = vld [vmem:[%s297 + $0x8] sm:$0xff]
        %v322 = vlaneseq
        %v323 = vand.u32 %v322, 127
        %324 = vset.pattern.permute.xlu0 0
        %325 = vperm.xlu0 %324, %v318
        %v326 = vpop.permute.xlu0 %325
        %327 = vset.pattern.permute.xlu0 0
        %328 = vperm.xlu0 %327, %v319
        %v329 = vpop.permute.xlu0 %328
        %vm330 = vcmp.ge.s32.totalorder %v323, %v326
        %vm331 = vcmp.ge.s32.totalorder %v323, %v329
        %332 = vset.pattern.permute.xlu0 0
        %333 = vperm.xlu0 %332, %v320
        %v334 = vpop.permute.xlu0 %333
        %335 = vset.pattern.permute.xlu0 0
        %336 = vperm.xlu0 %335, %v321
        %v337 = vpop.permute.xlu0 %336
        %vm338 = vcmp.lt.s32.totalorder %v323, %v334
        %vm339 = vcmp.lt.s32.totalorder %v323, %v337
        %vm340 = vmand %vm330, %vm338
        %vm341 = vmand %vm331, %vm339
        %v342 = vsel %vm340, 1, 0
        %v343 = vsel %vm341, 1, 0
        %v344 = vcvt.s32.f32 %v342
        %v345 = vcvt.s32.f32 %v343
        %v346 = vpack.c.bf16 %v345, %v344
        %347 = vst [vmem:[#allocation3] sm:$0xff] %v346
      $region48: #{text_classification_forward.1} parent=43 // pred_fallthru
        _
      %v348 = vld [vmem:[%s2] sm:$0x1]
      %s349 = smul.u32 %s22, 512
      %v350 = vstv %s349
      %v351 = vsub.s32 %v348, %v350
      %v352 = vlaneseq
      %v353 = vshrl.u32 %v352, 7
      %v354 = vadd.s32 %v353, 8
      %v355 = vadd.s32 %v353, 16
      %v356 = vadd.s32 %v353, 24
      %v357 = vadd.s32 %v353, 32
      %v358 = vadd.s32 %v353, 40
      %v359 = vadd.s32 %v353, 48
      %v360 = vadd.s32 %v353, 56
      %v361 = vadd.s32 %v353, 64
      %v362 = vadd.s32 %v353, 72
      %v363 = vadd.s32 %v353, 80
      %v364 = vadd.s32 %v353, 88
      %v365 = vadd.s32 %v353, 96
      %v366 = vadd.s32 %v353, 104
      %v367 = vadd.s32 %v353, 112
      %v368 = vadd.s32 %v353, 120
      %v369 = vadd.s32 %v353, 128
      %v370 = vadd.s32 %v353, 136
      %v371 = vadd.s32 %v353, 144
      %v372 = vadd.s32 %v353, 152
      %v373 = vadd.s32 %v353, 160
      %v374 = vadd.s32 %v353, 168
      %v375 = vadd.s32 %v353, 176
      %v376 = vadd.s32 %v353, 184
      %v377 = vadd.s32 %v353, 192
      %v378 = vadd.s32 %v353, 200
      %v379 = vadd.s32 %v353, 208
      %v380 = vadd.s32 %v353, 216
      %v381 = vadd.s32 %v353, 224
      %v382 = vadd.s32 %v353, 232
      %v383 = vadd.s32 %v353, 240
      %v384 = vadd.s32 %v353, 248
      %v385 = vadd.s32 %v353, 256
      %v386 = vadd.s32 %v353, 264
      %v387 = vadd.s32 %v353, 272
      %v388 = vadd.s32 %v353, 280
      %v389 = vadd.s32 %v353, 288
      %v390 = vadd.s32 %v353, 296
      %v391 = vadd.s32 %v353, 304
      %v392 = vadd.s32 %v353, 312
      %v393 = vadd.s32 %v353, 320
      %v394 = vadd.s32 %v353, 328
      %v395 = vadd.s32 %v353, 336
      %v396 = vadd.s32 %v353, 344
      %v397 = vadd.s32 %v353, 352
      %v398 = vadd.s32 %v353, 360
      %v399 = vadd.s32 %v353, 368
      %v400 = vadd.s32 %v353, 376
      %v401 = vadd.s32 %v353, 384
      %v402 = vadd.s32 %v353, 392
      %v403 = vadd.s32 %v353, 400
      %v404 = vadd.s32 %v353, 408
      %v405 = vadd.s32 %v353, 416
      %v406 = vadd.s32 %v353, 424
      %v407 = vadd.s32 %v353, 432
      %v408 = vadd.s32 %v353, 440
      %v409 = vadd.s32 %v353, 448
      %v410 = vadd.s32 %v353, 456
      %v411 = vadd.s32 %v353, 464
      %v412 = vadd.s32 %v353, 472
      %v413 = vadd.s32 %v353, 480
      %v414 = vadd.s32 %v353, 488
      %v415 = vadd.s32 %v353, 496
      %v416 = vadd.s32 %v353, 504
      %v417 = vlaneseq
      %v418 = vshrl.u32 %v417, 7
      %v419 = vsub.s32 0, %v418
      %v420 = vrot.slane %v351, %v419
      %vm421 = vcmp.eq.s32.totalorder %v353, %v420
      %vm422 = vcmp.eq.s32.totalorder %v354, %v420
      %vm423 = vcmp.eq.s32.totalorder %v355, %v420
      %vm424 = vcmp.eq.s32.totalorder %v356, %v420
      %vm425 = vcmp.eq.s32.totalorder %v357, %v420
      %vm426 = vcmp.eq.s32.totalorder %v358, %v420
      %vm427 = vcmp.eq.s32.totalorder %v359, %v420
      %vm428 = vcmp.eq.s32.totalorder %v360, %v420
      %vm429 = vcmp.eq.s32.totalorder %v361, %v420
      %vm430 = vcmp.eq.s32.totalorder %v362, %v420
      %vm431 = vcmp.eq.s32.totalorder %v363, %v420
      %vm432 = vcmp.eq.s32.totalorder %v364, %v420
      %vm433 = vcmp.eq.s32.totalorder %v365, %v420
      %vm434 = vcmp.eq.s32.totalorder %v366, %v420
      %vm435 = vcmp.eq.s32.totalorder %v367, %v420
      %vm436 = vcmp.eq.s32.totalorder %v368, %v420
      %vm437 = vcmp.eq.s32.totalorder %v369, %v420
      %vm438 = vcmp.eq.s32.totalorder %v370, %v420
      %vm439 = vcmp.eq.s32.totalorder %v371, %v420
      %vm440 = vcmp.eq.s32.totalorder %v372, %v420
      %vm441 = vcmp.eq.s32.totalorder %v373, %v420
      %vm442 = vcmp.eq.s32.totalorder %v374, %v420
      %vm443 = vcmp.eq.s32.totalorder %v375, %v420
      %vm444 = vcmp.eq.s32.totalorder %v376, %v420
      %vm445 = vcmp.eq.s32.totalorder %v377, %v420
      %vm446 = vcmp.eq.s32.totalorder %v378, %v420
      %vm447 = vcmp.eq.s32.totalorder %v379, %v420
      %vm448 = vcmp.eq.s32.totalorder %v380, %v420
      %vm449 = vcmp.eq.s32.totalorder %v381, %v420
      %vm450 = vcmp.eq.s32.totalorder %v382, %v420
      %vm451 = vcmp.eq.s32.totalorder %v383, %v420
      %vm452 = vcmp.eq.s32.totalorder %v384, %v420
      %vm453 = vcmp.eq.s32.totalorder %v385, %v420
      %vm454 = vcmp.eq.s32.totalorder %v386, %v420
      %vm455 = vcmp.eq.s32.totalorder %v387, %v420
      %vm456 = vcmp.eq.s32.totalorder %v388, %v420
      %vm457 = vcmp.eq.s32.totalorder %v389, %v420
      %vm458 = vcmp.eq.s32.totalorder %v390, %v420
      %vm459 = vcmp.eq.s32.totalorder %v391, %v420
      %vm460 = vcmp.eq.s32.totalorder %v392, %v420
      %vm461 = vcmp.eq.s32.totalorder %v393, %v420
      %vm462 = vcmp.eq.s32.totalorder %v394, %v420
      %vm463 = vcmp.eq.s32.totalorder %v395, %v420
      %vm464 = vcmp.eq.s32.totalorder %v396, %v420
      %vm465 = vcmp.eq.s32.totalorder %v397, %v420
      %vm466 = vcmp.eq.s32.totalorder %v398, %v420
      %vm467 = vcmp.eq.s32.totalorder %v399, %v420
      %vm468 = vcmp.eq.s32.totalorder %v400, %v420
      %vm469 = vcmp.eq.s32.totalorder %v401, %v420
      %vm470 = vcmp.eq.s32.totalorder %v402, %v420
      %vm471 = vcmp.eq.s32.totalorder %v403, %v420
      %vm472 = vcmp.eq.s32.totalorder %v404, %v420
      %vm473 = vcmp.eq.s32.totalorder %v405, %v420
      %vm474 = vcmp.eq.s32.totalorder %v406, %v420
      %vm475 = vcmp.eq.s32.totalorder %v407, %v420
      %vm476 = vcmp.eq.s32.totalorder %v408, %v420
      %vm477 = vcmp.eq.s32.totalorder %v409, %v420
      %vm478 = vcmp.eq.s32.totalorder %v410, %v420
      %vm479 = vcmp.eq.s32.totalorder %v411, %v420
      %vm480 = vcmp.eq.s32.totalorder %v412, %v420
      %vm481 = vcmp.eq.s32.totalorder %v413, %v420
      %vm482 = vcmp.eq.s32.totalorder %v414, %v420
      %vm483 = vcmp.eq.s32.totalorder %v415, %v420
      %vm484 = vcmp.eq.s32.totalorder %v416, %v420
      %v485 = vsel %vm421, 1, 0
      %v486 = vsel %vm422, 1, 0
      %v487 = vsel %vm423, 1, 0
      %v488 = vsel %vm424, 1, 0
      %v489 = vsel %vm425, 1, 0
      %v490 = vsel %vm426, 1, 0
      %v491 = vsel %vm427, 1, 0
      %v492 = vsel %vm428, 1, 0
      %v493 = vsel %vm429, 1, 0
      %v494 = vsel %vm430, 1, 0
      %v495 = vsel %vm431, 1, 0
      %v496 = vsel %vm432, 1, 0
      %v497 = vsel %vm433, 1, 0
      %v498 = vsel %vm434, 1, 0
      %v499 = vsel %vm435, 1, 0
      %v500 = vsel %vm436, 1, 0
      %v501 = vsel %vm437, 1, 0
      %v502 = vsel %vm438, 1, 0
      %v503 = vsel %vm439, 1, 0
      %v504 = vsel %vm440, 1, 0
      %v505 = vsel %vm441, 1, 0
      %v506 = vsel %vm442, 1, 0
      %v507 = vsel %vm443, 1, 0
      %v508 = vsel %vm444, 1, 0
      %v509 = vsel %vm445, 1, 0
      %v510 = vsel %vm446, 1, 0
      %v511 = vsel %vm447, 1, 0
      %v512 = vsel %vm448, 1, 0
      %v513 = vsel %vm449, 1, 0
      %v514 = vsel %vm450, 1, 0
      %v515 = vsel %vm451, 1, 0
      %v516 = vsel %vm452, 1, 0
      %v517 = vsel %vm453, 1, 0
      %v518 = vsel %vm454, 1, 0
      %v519 = vsel %vm455, 1, 0
      %v520 = vsel %vm456, 1, 0
      %v521 = vsel %vm457, 1, 0
      %v522 = vsel %vm458, 1, 0
      %v523 = vsel %vm459, 1, 0
      %v524 = vsel %vm460, 1, 0
      %v525 = vsel %vm461, 1, 0
      %v526 = vsel %vm462, 1, 0
      %v527 = vsel %vm463, 1, 0
      %v528 = vsel %vm464, 1, 0
      %v529 = vsel %vm465, 1, 0
      %v530 = vsel %vm466, 1, 0
      %v531 = vsel %vm467, 1, 0
      %v532 = vsel %vm468, 1, 0
      %v533 = vsel %vm469, 1, 0
      %v534 = vsel %vm470, 1, 0
      %v535 = vsel %vm471, 1, 0
      %v536 = vsel %vm472, 1, 0
      %v537 = vsel %vm473, 1, 0
      %v538 = vsel %vm474, 1, 0
      %v539 = vsel %vm475, 1, 0
      %v540 = vsel %vm476, 1, 0
      %v541 = vsel %vm477, 1, 0
      %v542 = vsel %vm478, 1, 0
      %v543 = vsel %vm479, 1, 0
      %v544 = vsel %vm480, 1, 0
      %v545 = vsel %vm481, 1, 0
      %v546 = vsel %vm482, 1, 0
      %v547 = vsel %vm483, 1, 0
      %v548 = vsel %vm484, 1, 0
      %v549 = vcvt.s32.f32 %v485
      %v550 = vcvt.s32.f32 %v486
      %v551 = vcvt.s32.f32 %v487
      %v552 = vcvt.s32.f32 %v488
      %v553 = vcvt.s32.f32 %v489
      %v554 = vcvt.s32.f32 %v490
      %v555 = vcvt.s32.f32 %v491
      %v556 = vcvt.s32.f32 %v492
      %v557 = vcvt.s32.f32 %v493
      %v558 = vcvt.s32.f32 %v494
      %v559 = vcvt.s32.f32 %v495
      %v560 = vcvt.s32.f32 %v496
      %v561 = vcvt.s32.f32 %v497
      %v562 = vcvt.s32.f32 %v498
      %v563 = vcvt.s32.f32 %v499
      %v564 = vcvt.s32.f32 %v500
      %v565 = vcvt.s32.f32 %v501
      %v566 = vcvt.s32.f32 %v502
      %v567 = vcvt.s32.f32 %v503
      %v568 = vcvt.s32.f32 %v504
      %v569 = vcvt.s32.f32 %v505
      %v570 = vcvt.s32.f32 %v506
      %v571 = vcvt.s32.f32 %v507
      %v572 = vcvt.s32.f32 %v508
      %v573 = vcvt.s32.f32 %v509
      %v574 = vcvt.s32.f32 %v510
      %v575 = vcvt.s32.f32 %v511
      %v576 = vcvt.s32.f32 %v512
      %v577 = vcvt.s32.f32 %v513
      %v578 = vcvt.s32.f32 %v514
      %v579 = vcvt.s32.f32 %v515
      %v580 = vcvt.s32.f32 %v516
      %v581 = vcvt.s32.f32 %v517
      %v582 = vcvt.s32.f32 %v518
      %v583 = vcvt.s32.f32 %v519
      %v584 = vcvt.s32.f32 %v520
      %v585 = vcvt.s32.f32 %v521
      %v586 = vcvt.s32.f32 %v522
      %v587 = vcvt.s32.f32 %v523
      %v588 = vcvt.s32.f32 %v524
      %v589 = vcvt.s32.f32 %v525
      %v590 = vcvt.s32.f32 %v526
      %v591 = vcvt.s32.f32 %v527
      %v592 = vcvt.s32.f32 %v528
      %v593 = vcvt.s32.f32 %v529
      %v594 = vcvt.s32.f32 %v530
      %v595 = vcvt.s32.f32 %v531
      %v596 = vcvt.s32.f32 %v532
      %v597 = vcvt.s32.f32 %v533
      %v598 = vcvt.s32.f32 %v534
      %v599 = vcvt.s32.f32 %v535
      %v600 = vcvt.s32.f32 %v536
      %v601 = vcvt.s32.f32 %v537
      %v602 = vcvt.s32.f32 %v538
      %v603 = vcvt.s32.f32 %v539
      %v604 = vcvt.s32.f32 %v540
      %v605 = vcvt.s32.f32 %v541
      %v606 = vcvt.s32.f32 %v542
      %v607 = vcvt.s32.f32 %v543
      %v608 = vcvt.s32.f32 %v544
      %v609 = vcvt.s32.f32 %v545
      %v610 = vcvt.s32.f32 %v546
      %v611 = vcvt.s32.f32 %v547
      %v612 = vcvt.s32.f32 %v548
      %v613 = vpack.c.bf16 %v550, %v549
      %v614 = vpack.c.bf16 %v552, %v551
      %v615 = vpack.c.bf16 %v554, %v553
      %v616 = vpack.c.bf16 %v556, %v555
      %v617 = vpack.c.bf16 %v558, %v557
      %v618 = vpack.c.bf16 %v560, %v559
      %v619 = vpack.c.bf16 %v562, %v561
      %v620 = vpack.c.bf16 %v564, %v563
      %v621 = vpack.c.bf16 %v566, %v565
      %v622 = vpack.c.bf16 %v568, %v567
      %v623 = vpack.c.bf16 %v570, %v569
      %v624 = vpack.c.bf16 %v572, %v571
      %v625 = vpack.c.bf16 %v574, %v573
      %v626 = vpack.c.bf16 %v576, %v575
      %v627 = vpack.c.bf16 %v578, %v577
      %v628 = vpack.c.bf16 %v580, %v579
      %v629 = vpack.c.bf16 %v582, %v581
      %v630 = vpack.c.bf16 %v584, %v583
      %v631 = vpack.c.bf16 %v586, %v585
      %v632 = vpack.c.bf16 %v588, %v587
      %v633 = vpack.c.bf16 %v590, %v589
      %v634 = vpack.c.bf16 %v592, %v591
      %v635 = vpack.c.bf16 %v594, %v593
      %v636 = vpack.c.bf16 %v596, %v595
      %v637 = vpack.c.bf16 %v598, %v597
      %v638 = vpack.c.bf16 %v600, %v599
      %v639 = vpack.c.bf16 %v602, %v601
      %v640 = vpack.c.bf16 %v604, %v603
      %v641 = vpack.c.bf16 %v606, %v605
      %v642 = vpack.c.bf16 %v608, %v607
      %v643 = vpack.c.bf16 %v610, %v609
      %v644 = vpack.c.bf16 %v612, %v611
      %v645 = vld [vmem:[#allocation3] sm:$0xff]
      %646 = vmatprep.subr.bf16.mxu0 0
      %647 = vmatpush1.bf16.xpose.msra.mxu0 %v613
      %648 = vmatprep.subr.bf16.mxu0 0
      %649 = vmatpush1.bf16.xpose.msra.mxu0 %v614
      %650 = vmatprep.subr.bf16.mxu0 0
      %651 = vmatpush1.bf16.xpose.msra.mxu0 %v615
      %652 = vmatprep.subr.bf16.mxu0 0
      %653 = vmatpush1.bf16.xpose.msra.mxu0 %v616
      %654 = vmatprep.subr.bf16.mxu0 0
      %655 = vmatpush1.bf16.xpose.msra.mxu0 %v617
      %656 = vmatprep.subr.bf16.mxu0 0
      %657 = vmatpush1.bf16.xpose.msra.mxu0 %v618
      %658 = vmatprep.subr.bf16.mxu0 0
      %659 = vmatpush1.bf16.xpose.msra.mxu0 %v619
      %660 = vmatprep.subr.bf16.mxu0 0
      %661 = vmatpush1.bf16.xpose.msra.mxu0 %v620
      %662 = vmatprep.subr.bf16.mxu0 0
      %663 = vmatpush1.bf16.xpose.msra.mxu0 %v621
      %664 = vmatprep.subr.bf16.mxu0 0
      %665 = vmatpush1.bf16.xpose.msra.mxu0 %v622
      %666 = vmatprep.subr.bf16.mxu0 0
      %667 = vmatpush1.bf16.xpose.msra.mxu0 %v623
      %668 = vmatprep.subr.bf16.mxu0 0
      %669 = vmatpush1.bf16.xpose.msra.mxu0 %v624
      %670 = vmatprep.subr.bf16.mxu0 0
      %671 = vmatpush1.bf16.xpose.msra.mxu0 %v625
      %672 = vmatprep.subr.bf16.mxu0 0
      %673 = vmatpush1.bf16.xpose.msra.mxu0 %v626
      %674 = vmatprep.subr.bf16.mxu0 0
      %675 = vmatpush1.bf16.xpose.msra.mxu0 %v627
      %676 = vmatprep.subr.bf16.mxu0 0
      %677 = vmatpush1.bf16.xpose.msra.mxu0 %v628
      %678 = vmatprep.mubr.bf16.mxu0 0
      %679 = vmatmul.mubr.bf16.gmra.mrb[0].mxu0 %v645
      %v680 = vpop.f32.mrb[0].mxu0
      %v681 = vadd.f32 0.0, %v680
      %v682 = vpop.f32.mrb[0].mxu0
      %v683 = vadd.f32 0.0, %v682
      %v684 = vpop.f32.mrb[0].mxu0
      %v685 = vadd.f32 0.0, %v684
      %v686 = vpop.f32.mrb[0].mxu0
      %v687 = vadd.f32 0.0, %v686
      %688 = vdwg.mxu0
      %689 = vmatprep.subr.bf16.mxu0 0
      %690 = vmatpush1.bf16.xpose.msra.mxu0 %v629
      %691 = vmatprep.subr.bf16.mxu0 0
      %692 = vmatpush1.bf16.xpose.msra.mxu0 %v630
      %693 = vmatprep.subr.bf16.mxu0 0
      %694 = vmatpush1.bf16.xpose.msra.mxu0 %v631
      %695 = vmatprep.subr.bf16.mxu0 0
      %696 = vmatpush1.bf16.xpose.msra.mxu0 %v632
      %697 = vmatprep.subr.bf16.mxu0 0
      %698 = vmatpush1.bf16.xpose.msra.mxu0 %v633
      %699 = vmatprep.subr.bf16.mxu0 0
      %700 = vmatpush1.bf16.xpose.msra.mxu0 %v634
      %701 = vmatprep.subr.bf16.mxu0 0
      %702 = vmatpush1.bf16.xpose.msra.mxu0 %v635
      %703 = vmatprep.subr.bf16.mxu0 0
      %704 = vmatpush1.bf16.xpose.msra.mxu0 %v636
      %705 = vmatprep.subr.bf16.mxu0 0
      %706 = vmatpush1.bf16.xpose.msra.mxu0 %v637
      %707 = vmatprep.subr.bf16.mxu0 0
      %708 = vmatpush1.bf16.xpose.msra.mxu0 %v638
      %709 = vmatprep.subr.bf16.mxu0 0
      %710 = vmatpush1.bf16.xpose.msra.mxu0 %v639
      %711 = vmatprep.subr.bf16.mxu0 0
      %712 = vmatpush1.bf16.xpose.msra.mxu0 %v640
      %713 = vmatprep.subr.bf16.mxu0 0
      %714 = vmatpush1.bf16.xpose.msra.mxu0 %v641
      %715 = vmatprep.subr.bf16.mxu0 0
      %716 = vmatpush1.bf16.xpose.msra.mxu0 %v642
      %717 = vmatprep.subr.bf16.mxu0 0
      %718 = vmatpush1.bf16.xpose.msra.mxu0 %v643
      %719 = vmatprep.subr.bf16.mxu0 0
      %720 = vmatpush1.bf16.xpose.msra.mxu0 %v644
      %721 = vmatprep.mubr.bf16.mxu0 0
      %722 = vmatmul.mubr.bf16.gmra.mrb[0].mxu0 %v645
      %v723 = vpop.f32.mrb[0].mxu0
      %v724 = vadd.f32 0.0, %v723
      %v725 = vpop.f32.mrb[0].mxu0
      %v726 = vadd.f32 0.0, %v725
      %v727 = vpop.f32.mrb[0].mxu0
      %v728 = vadd.f32 0.0, %v727
      %v729 = vpop.f32.mrb[0].mxu0
      %v730 = vadd.f32 0.0, %v729
      %731 = vdwg.mxu0
      %v732 = vld [vmem:[#allocation2] sm:$0xff]
      %v733 = vld [vmem:[#allocation2 + $0x8] sm:$0xff]
      %v734 = vpack.c.bf16 %v685, %v681
      %v735 = vpack.c.bf16 %v687, %v683
      %v736 = vpack.c.bf16 %v728, %v724
      %v737 = vpack.c.bf16 %v730, %v726
      %v738 = vld [vmem:[%s303] sm:$0xf]
      %v739 = vld [vmem:[%s303 + $0x4] sm:$0xf]
      %v740 = vld [vmem:[%s303 + $0x8] sm:$0xf]
      %v741 = vld [vmem:[%s303 + $0xc] sm:$0xf]
      %v742 = vld [vmem:[%s303 + $0x10] sm:$0xf]
      %v743 = vld [vmem:[%s303 + $0x14] sm:$0xf]
      %v744 = vld [vmem:[%s303 + $0x18] sm:$0xf]
      %v745 = vld [vmem:[%s303 + $0x1c] sm:$0xf]
      %v746 = vld [vmem:[%s303 + $0x20] sm:$0xf]
      %v747 = vld [vmem:[%s303 + $0x24] sm:$0xf]
      %v748 = vld [vmem:[%s303 + $0x28] sm:$0xf]
      %v749 = vld [vmem:[%s303 + $0x2c] sm:$0xf]
      %v750 = vld [vmem:[%s303 + $0x30] sm:$0xf]
      %v751 = vld [vmem:[%s303 + $0x34] sm:$0xf]
      %v752 = vld [vmem:[%s303 + $0x38] sm:$0xf]
      %v753 = vld [vmem:[%s303 + $0x3c] sm:$0xf]
      %v754 = vld [vmem:[%s303 + $0x40] sm:$0xf]
      %v755 = vld [vmem:[%s303 + $0x44] sm:$0xf]
      %v756 = vld [vmem:[%s303 + $0x48] sm:$0xf]
      %v757 = vld [vmem:[%s303 + $0x4c] sm:$0xf]
      %v758 = vld [vmem:[%s303 + $0x50] sm:$0xf]
      %v759 = vld [vmem:[%s303 + $0x54] sm:$0xf]
      %v760 = vld [vmem:[%s303 + $0x58] sm:$0xf]
      %v761 = vld [vmem:[%s303 + $0x5c] sm:$0xf]
      %v762 = vld [vmem:[%s303 + $0x60] sm:$0xf]
      %v763 = vld [vmem:[%s303 + $0x64] sm:$0xf]
      %v764 = vld [vmem:[%s303 + $0x68] sm:$0xf]
      %v765 = vld [vmem:[%s303 + $0x6c] sm:$0xf]
      %v766 = vld [vmem:[%s303 + $0x70] sm:$0xf]
      %v767 = vld [vmem:[%s303 + $0x74] sm:$0xf]
      %v768 = vld [vmem:[%s303 + $0x78] sm:$0xf]
      %v769 = vld [vmem:[%s303 + $0x7c] sm:$0xf]
      %v770 = vld [vmem:[%s303 + $0x80] sm:$0xf]
      %v771 = vld [vmem:[%s303 + $0x84] sm:$0xf]
      %v772 = vld [vmem:[%s303 + $0x88] sm:$0xf]
      %v773 = vld [vmem:[%s303 + $0x8c] sm:$0xf]
      %v774 = vld [vmem:[%s303 + $0x90] sm:$0xf]
      %v775 = vld [vmem:[%s303 + $0x94] sm:$0xf]
      %v776 = vld [vmem:[%s303 + $0x98] sm:$0xf]
      %v777 = vld [vmem:[%s303 + $0x9c] sm:$0xf]
      %v778 = vld [vmem:[%s303 + $0xa0] sm:$0xf]
      %v779 = vld [vmem:[%s303 + $0xa4] sm:$0xf]
      %v780 = vld [vmem:[%s303 + $0xa8] sm:$0xf]
      %v781 = vld [vmem:[%s303 + $0xac] sm:$0xf]
      %v782 = vld [vmem:[%s303 + $0xb0] sm:$0xf]
      %v783 = vld [vmem:[%s303 + $0xb4] sm:$0xf]
      %v784 = vld [vmem:[%s303 + $0xb8] sm:$0xf]
      %v785 = vld [vmem:[%s303 + $0xbc] sm:$0xf]
      %v786 = vld [vmem:[%s303 + $0xc0] sm:$0xf]
      %v787 = vld [vmem:[%s303 + $0xc4] sm:$0xf]
      %v788 = vld [vmem:[%s303 + $0xc8] sm:$0xf]
      %v789 = vld [vmem:[%s303 + $0xcc] sm:$0xf]
      %v790 = vld [vmem:[%s303 + $0xd0] sm:$0xf]
      %v791 = vld [vmem:[%s303 + $0xd4] sm:$0xf]
      %v792 = vld [vmem:[%s303 + $0xd8] sm:$0xf]
      %v793 = vld [vmem:[%s303 + $0xdc] sm:$0xf]
      %v794 = vld [vmem:[%s303 + $0xe0] sm:$0xf]
      %v795 = vld [vmem:[%s303 + $0xe4] sm:$0xf]
      %v796 = vld [vmem:[%s303 + $0xe8] sm:$0xf]
      %v797 = vld [vmem:[%s303 + $0xec] sm:$0xf]
      %v798 = vld [vmem:[%s303 + $0xf0] sm:$0xf]
      %v799 = vld [vmem:[%s303 + $0xf4] sm:$0xf]
      %v800 = vld [vmem:[%s303 + $0xf8] sm:$0xf]
      %v801 = vld [vmem:[%s303 + $0xfc] sm:$0xf]
      %v866 = vunpack.c.l.b16 %v738
      %v867 = vunpack.c.l.b16 %v739
      %v868 = vunpack.c.l.b16 %v740
      %v869 = vunpack.c.l.b16 %v741
      %v870 = vunpack.c.l.b16 %v742
      %v871 = vunpack.c.l.b16 %v743
      %v872 = vunpack.c.l.b16 %v744
      %v873 = vunpack.c.l.b16 %v745
      %v874 = vunpack.c.l.b16 %v746
      %v875 = vunpack.c.l.b16 %v747
      %v876 = vunpack.c.l.b16 %v748
      %v877 = vunpack.c.l.b16 %v749
      %v878 = vunpack.c.l.b16 %v750
      %v879 = vunpack.c.l.b16 %v751
      %v880 = vunpack.c.l.b16 %v752
      %v881 = vunpack.c.l.b16 %v753
      %v882 = vunpack.c.l.b16 %v754
      %v883 = vunpack.c.l.b16 %v755
      %v884 = vunpack.c.l.b16 %v756
      %v885 = vunpack.c.l.b16 %v757
      %v886 = vunpack.c.l.b16 %v758
      %v887 = vunpack.c.l.b16 %v759
      %v888 = vunpack.c.l.b16 %v760
      %v889 = vunpack.c.l.b16 %v761
      %v890 = vunpack.c.l.b16 %v762
      %v891 = vunpack.c.l.b16 %v763
      %v892 = vunpack.c.l.b16 %v764
      %v893 = vunpack.c.l.b16 %v765
      %v894 = vunpack.c.l.b16 %v766
      %v895 = vunpack.c.l.b16 %v767
      %v896 = vunpack.c.l.b16 %v768
      %v897 = vunpack.c.l.b16 %v769
      %v898 = vunpack.c.l.b16 %v770
      %v899 = vunpack.c.l.b16 %v771
      %v900 = vunpack.c.l.b16 %v772
      %v901 = vunpack.c.l.b16 %v773
      %v902 = vunpack.c.l.b16 %v774
      %v903 = vunpack.c.l.b16 %v775
      %v904 = vunpack.c.l.b16 %v776
      %v905 = vunpack.c.l.b16 %v777
      %v906 = vunpack.c.l.b16 %v778
      %v907 = vunpack.c.l.b16 %v779
      %v908 = vunpack.c.l.b16 %v780
      %v909 = vunpack.c.l.b16 %v781
      %v910 = vunpack.c.l.b16 %v782
      %v911 = vunpack.c.l.b16 %v783
      %v912 = vunpack.c.l.b16 %v784
      %v913 = vunpack.c.l.b16 %v785
      %v914 = vunpack.c.l.b16 %v786
      %v915 = vunpack.c.l.b16 %v787
      %v916 = vunpack.c.l.b16 %v788
      %v917 = vunpack.c.l.b16 %v789
      %v918 = vunpack.c.l.b16 %v790
      %v919 = vunpack.c.l.b16 %v791
      %v920 = vunpack.c.l.b16 %v792
      %v921 = vunpack.c.l.b16 %v793
      %v922 = vunpack.c.l.b16 %v794
      %v923 = vunpack.c.l.b16 %v795
      %v924 = vunpack.c.l.b16 %v796
      %v925 = vunpack.c.l.b16 %v797
      %v926 = vunpack.c.l.b16 %v798
      %v927 = vunpack.c.l.b16 %v799
      %v928 = vunpack.c.l.b16 %v800
      %v929 = vunpack.c.l.b16 %v801
      %v930 = vpack.c.b16 %v867, %v866
      %v931 = vpack.c.b16 %v869, %v868
      %v932 = vpack.c.b16 %v871, %v870
      %v933 = vpack.c.b16 %v873, %v872
      %v934 = vpack.c.b16 %v875, %v874
      %v935 = vpack.c.b16 %v877, %v876
      %v936 = vpack.c.b16 %v879, %v878
      %v937 = vpack.c.b16 %v881, %v880
      %v938 = vpack.c.b16 %v883, %v882
      %v939 = vpack.c.b16 %v885, %v884
      %v940 = vpack.c.b16 %v887, %v886
      %v941 = vpack.c.b16 %v889, %v888
      %v942 = vpack.c.b16 %v891, %v890
      %v943 = vpack.c.b16 %v893, %v892
      %v944 = vpack.c.b16 %v895, %v894
      %v945 = vpack.c.b16 %v897, %v896
      %v946 = vpack.c.b16 %v899, %v898
      %v947 = vpack.c.b16 %v901, %v900
      %v948 = vpack.c.b16 %v903, %v902
      %v949 = vpack.c.b16 %v905, %v904
      %v950 = vpack.c.b16 %v907, %v906
      %v951 = vpack.c.b16 %v909, %v908
      %v952 = vpack.c.b16 %v911, %v910
      %v953 = vpack.c.b16 %v913, %v912
      %v954 = vpack.c.b16 %v915, %v914
      %v955 = vpack.c.b16 %v917, %v916
      %v956 = vpack.c.b16 %v919, %v918
      %v957 = vpack.c.b16 %v921, %v920
      %v958 = vpack.c.b16 %v923, %v922
      %v959 = vpack.c.b16 %v925, %v924
      %v960 = vpack.c.b16 %v927, %v926
      %v961 = vpack.c.b16 %v929, %v928
      %994 = vmatprep.subr.bf16.mxu0 0
      %995 = vmatpush1.bf16.msra.mxu0 %v930
      %996 = vmatprep.subr.bf16.mxu0 0
      %997 = vmatpush1.bf16.msra.mxu0 %v931
      %998 = vmatprep.subr.bf16.mxu0 0
      %999 = vmatpush1.bf16.msra.mxu0 %v932
      %1000 = vmatprep.subr.bf16.mxu0 0
      %1001 = vmatpush1.bf16.msra.mxu0 %v933
      %1002 = vmatprep.subr.bf16.mxu0 0
      %1003 = vmatpush1.bf16.msra.mxu0 %v934
      %1004 = vmatprep.subr.bf16.mxu0 0
      %1005 = vmatpush1.bf16.msra.mxu0 %v935
      %1006 = vmatprep.subr.bf16.mxu0 0
      %1007 = vmatpush1.bf16.msra.mxu0 %v936
      %1008 = vmatprep.subr.bf16.mxu0 0
      %1009 = vmatpush1.bf16.msra.mxu0 %v937
      %1010 = vmatprep.subr.bf16.mxu0 0
      %1011 = vmatpush1.bf16.msra.mxu0 %v938
      %1012 = vmatprep.subr.bf16.mxu0 0
      %1013 = vmatpush1.bf16.msra.mxu0 %v939
      %1014 = vmatprep.subr.bf16.mxu0 0
      %1015 = vmatpush1.bf16.msra.mxu0 %v940
      %1016 = vmatprep.subr.bf16.mxu0 0
      %1017 = vmatpush1.bf16.msra.mxu0 %v941
      %1018 = vmatprep.subr.bf16.mxu0 0
      %1019 = vmatpush1.bf16.msra.mxu0 %v942
      %1020 = vmatprep.subr.bf16.mxu0 0
      %1021 = vmatpush1.bf16.msra.mxu0 %v943
      %1022 = vmatprep.subr.bf16.mxu0 0
      %1023 = vmatpush1.bf16.msra.mxu0 %v944
      %1024 = vmatprep.subr.bf16.mxu0 0
      %1025 = vmatpush1.bf16.msra.mxu0 %v945
      %1026 = vmatprep.mubr.bf16.mxu0 %v735
      %1027 = vmatmul.mubr.bf16.gmra.mrb[0].mxu0 %v734
      %v1028 = vpop.f32.mrb[0].mxu0
      %v1029 = vadd.f32 0.0, %v1028
      %v1030 = vpop.f32.mrb[0].mxu0
      %v1031 = vpop.f32.mrb[0].mxu0
      %v1032 = vadd.f32 0.0, %v1031
      %v1033 = vpop.f32.mrb[0].mxu0
      %1034 = vdwg.mxu0
      %1035 = vmatprep.subr.bf16.mxu0 0
      %1036 = vmatpush1.bf16.msra.mxu0 %v946
      %1037 = vmatprep.subr.bf16.mxu0 0
      %1038 = vmatpush1.bf16.msra.mxu0 %v947
      %1039 = vmatprep.subr.bf16.mxu0 0
      %1040 = vmatpush1.bf16.msra.mxu0 %v948
      %1041 = vmatprep.subr.bf16.mxu0 0
      %1042 = vmatpush1.bf16.msra.mxu0 %v949
      %1043 = vmatprep.subr.bf16.mxu0 0
      %1044 = vmatpush1.bf16.msra.mxu0 %v950
      %1045 = vmatprep.subr.bf16.mxu0 0
      %1046 = vmatpush1.bf16.msra.mxu0 %v951
      %1047 = vmatprep.subr.bf16.mxu0 0
      %1048 = vmatpush1.bf16.msra.mxu0 %v952
      %1049 = vmatprep.subr.bf16.mxu0 0
      %1050 = vmatpush1.bf16.msra.mxu0 %v953
      %1051 = vmatprep.subr.bf16.mxu0 0
      %1052 = vmatpush1.bf16.msra.mxu0 %v954
      %1053 = vmatprep.subr.bf16.mxu0 0
      %1054 = vmatpush1.bf16.msra.mxu0 %v955
      %1055 = vmatprep.subr.bf16.mxu0 0
      %1056 = vmatpush1.bf16.msra.mxu0 %v956
      %1057 = vmatprep.subr.bf16.mxu0 0
      %1058 = vmatpush1.bf16.msra.mxu0 %v957
      %1059 = vmatprep.subr.bf16.mxu0 0
      %1060 = vmatpush1.bf16.msra.mxu0 %v958
      %1061 = vmatprep.subr.bf16.mxu0 0
      %1062 = vmatpush1.bf16.msra.mxu0 %v959
      %1063 = vmatprep.subr.bf16.mxu0 0
      %1064 = vmatpush1.bf16.msra.mxu0 %v960
      %1065 = vmatprep.subr.bf16.mxu0 0
      %1066 = vmatpush1.bf16.msra.mxu0 %v961
      %1067 = vmatprep.mubr.bf16.mxu0 %v737
      %1068 = vmatmul.mubr.bf16.gmra.mrb[0].mxu0 %v736
      %v1069 = vpop.f32.mrb[0].mxu0
      %v1070 = vadd.f32 %v1029, %v1069
      %v1071 = vpop.f32.mrb[0].mxu0
      %v1072 = vpop.f32.mrb[0].mxu0
      %v1073 = vadd.f32 %v1032, %v1072
      %v1074 = vpop.f32.mrb[0].mxu0
      %1075 = vdwg.mxu0
      %v1076 = vadd.f32 %v732, %v1070
      %v1077 = vadd.f32 %v733, %v1073
      %1078 = vst [vmem:[#allocation2] sm:$0xff] %v1076
      %1079 = vst [vmem:[#allocation2 + $0x8] sm:$0xff] %v1077
      %p1080 = scmp.eq.s32.totalorder %s22, 1
      // Predicated region
      $region49: #{text_classification_forward.1} parent=43 // pred_check
        %p1081 = pneg %p1080
      $region50: #{text_classification_forward.1} parent=43 // pred_check_branch
        %1083 = sbr.rel (%p1081) target = $region52
      $region51: #{text_classification_forward.1} parent=43 // pred_region
        %v1084 = vld [vmem:[%s297] sm:$0xff]
        %v1085 = vld [vmem:[%s297 + $0x8] sm:$0xff]
        %v1086 = vld [vmem:[%s291] sm:$0xff]
        %v1087 = vld [vmem:[%s291 + $0x8] sm:$0xff]
        %v1088 = vsub.s32 %v1084, %v1086
        %v1089 = vsub.s32 %v1085, %v1087
        %v1090 = vcvt.s32.f32 %v1088
        %v1091 = vcvt.s32.f32 %v1089
        %vm1092 = vcmp.gt.f32.partialorder %v1090, 0.0
        %vm1093 = vcmp.gt.f32.partialorder %v1091, 0.0
        %v1094 = vmax.f32 %v1090, 1.0
        %v1095 = vmax.f32 %v1091, 1.0
        %v1096 = vrcp.pop %v1094
        %v1097 = vrcp.pop %v1095
        %v1098 = vsel %vm1092, %v1096, 0.0
        %v1099 = vsel %vm1093, %v1097, 0.0
        %v1100 = vld [vmem:[#allocation2] sm:$0xff]
        %v1101 = vld [vmem:[#allocation2 + $0x8] sm:$0xff]
        %1103 = vset.pattern.permute.xlu0 0
        %1104 = vperm.xlu0 %1103, %v1098
        %v1105 = vpop.permute.xlu0 %1104
        %1108 = vset.pattern.permute.xlu0 0
        %1109 = vperm.xlu0 %1108, %v1099
        %v1110 = vpop.permute.xlu0 %1109
        %v1112 = vmul.f32 %v1100, %v1105
        %v1113 = vmul.f32 %v1101, %v1110
        %v1114 = vpack.c.bf16 %v1113, %v1112
        %v1115 = vld [vmem:[%s4] sm:$0xf]
        %v1116 = vld [vmem:[%s4 + $0x4] sm:$0xf]
        %v1117 = vld [vmem:[%s4 + $0x8] sm:$0xf]
        %v1118 = vld [vmem:[%s4 + $0xc] sm:$0xf]
        %v1119 = vld [vmem:[%s4 + $0x10] sm:$0xf]
        %v1120 = vld [vmem:[%s4 + $0x14] sm:$0xf]
        %v1121 = vld [vmem:[%s4 + $0x18] sm:$0xf]
        %v1122 = vld [vmem:[%s4 + $0x1c] sm:$0xf]
        %v1123 = vld [vmem:[%s4 + $0x20] sm:$0xf]
        %v1124 = vld [vmem:[%s4 + $0x24] sm:$0xf]
        %v1125 = vld [vmem:[%s4 + $0x28] sm:$0xf]
        %v1126 = vld [vmem:[%s4 + $0x2c] sm:$0xf]
        %v1127 = vld [vmem:[%s4 + $0x30] sm:$0xf]
        %v1128 = vld [vmem:[%s4 + $0x34] sm:$0xf]
        %v1129 = vld [vmem:[%s4 + $0x38] sm:$0xf]
        %v1130 = vld [vmem:[%s4 + $0x3c] sm:$0xf]
        %v1131 = vld [vmem:[%s5] sm:$0x1]
        %v1133 = vlaneseq
        %v1134 = vshrl.u32 %v1133, 7
        %v1135 = vsub.s32 0, %v1134
        %v1136 = vrot.slane %v1131, %v1135
        %v1154 = vunpack.c.l.b16 %v1115
        %v1155 = vunpack.c.l.b16 %v1116
        %v1156 = vunpack.c.l.b16 %v1117
        %v1157 = vunpack.c.l.b16 %v1118
        %v1158 = vunpack.c.l.b16 %v1119
        %v1159 = vunpack.c.l.b16 %v1120
        %v1160 = vunpack.c.l.b16 %v1121
        %v1161 = vunpack.c.l.b16 %v1122
        %v1162 = vunpack.c.l.b16 %v1123
        %v1163 = vunpack.c.l.b16 %v1124
        %v1164 = vunpack.c.l.b16 %v1125
        %v1165 = vunpack.c.l.b16 %v1126
        %v1166 = vunpack.c.l.b16 %v1127
        %v1167 = vunpack.c.l.b16 %v1128
        %v1168 = vunpack.c.l.b16 %v1129
        %v1169 = vunpack.c.l.b16 %v1130
        %v1170 = vpack.c.b16 %v1155, %v1154
        %v1171 = vpack.c.b16 %v1157, %v1156
        %v1172 = vpack.c.b16 %v1159, %v1158
        %v1173 = vpack.c.b16 %v1161, %v1160
        %v1174 = vpack.c.b16 %v1163, %v1162
        %v1175 = vpack.c.b16 %v1165, %v1164
        %v1176 = vpack.c.b16 %v1167, %v1166
        %v1177 = vpack.c.b16 %v1169, %v1168
        %1186 = vmatprep.subr.bf16.mxu0 0
        %1187 = vmatpush1.bf16.msra.mxu0 %v1170
        %1188 = vmatprep.subr.bf16.mxu0 0
        %1189 = vmatpush1.bf16.msra.mxu0 %v1171
        %1190 = vmatprep.subr.bf16.mxu0 0
        %1191 = vmatpush1.bf16.msra.mxu0 %v1172
        %1192 = vmatprep.subr.bf16.mxu0 0
        %1193 = vmatpush1.bf16.msra.mxu0 %v1173
        %1194 = vmatprep.subr.bf16.mxu0 0
        %1195 = vmatpush1.bf16.msra.mxu0 %v1174
        %1196 = vmatprep.subr.bf16.mxu0 0
        %1197 = vmatpush1.bf16.msra.mxu0 %v1175
        %1198 = vmatprep.subr.bf16.mxu0 0
        %1199 = vmatpush1.bf16.msra.mxu0 %v1176
        %1200 = vmatprep.subr.bf16.mxu0 0
        %1201 = vmatpush1.bf16.msra.mxu0 %v1177
        %1202 = vmatprep.subr.bf16.mxu0 0
        %1203 = vmatpush1.bf16.msra.mxu0 0
        %1204 = vmatprep.subr.bf16.mxu0 0
        %1205 = vmatpush1.bf16.msra.mxu0 0
        %1206 = vmatprep.subr.bf16.mxu0 0
        %1207 = vmatpush1.bf16.msra.mxu0 0
        %1208 = vmatprep.subr.bf16.mxu0 0
        %1209 = vmatpush1.bf16.msra.mxu0 0
        %1210 = vmatprep.subr.bf16.mxu0 0
        %1211 = vmatpush1.bf16.msra.mxu0 0
        %1212 = vmatprep.subr.bf16.mxu0 0
        %1213 = vmatpush1.bf16.msra.mxu0 0
        %1214 = vmatprep.subr.bf16.mxu0 0
        %1215 = vmatpush1.bf16.msra.mxu0 0
        %1216 = vmatprep.subr.bf16.mxu0 0
        %1217 = vmatpush1.bf16.msra.mxu0 0
        %1218 = vmatprep.mubr.bf16.mxu0 0
        %1219 = vmatmul.mubr.bf16.gmra.mrb[0].mxu0 %v1114
        %v1220 = vpop.f32.mrb[0].mxu0
        %v1221 = vadd.f32 %v1136, %v1220
        %v1222 = vpop.f32.mrb[0].mxu0
        %v1223 = vpop.f32.mrb[0].mxu0
        %v1224 = vadd.f32 %v1136, %v1223
        %v1225 = vpop.f32.mrb[0].mxu0
        %1226 = vdwg.mxu0
        %1227 = vst [vmem:[%s309] sm:$0xff] %v1221
        %1228 = vst [vmem:[%s309 + $0x8] sm:$0xff] %v1224
      $region52: #{text_classification_forward.1} parent=43 // pred_fallthru
        _
      %s1229 = smul.u32 2, %s21
      %p1230 = scmp.lt.s32.totalorder %s1229, 1
      %s1231 = scalar_select %p1230, %s1229, 1
      %s1232 = smul.addr %s1231, 8
      %s1233 = scalar_lea.vmem %s6, %s1232
      // Predicated region
      $region53: #{text_classification_forward.1} parent=43 // pred_check
        %p1234 = pneg %p188
      $region54: #{text_classification_forward.1} parent=43 // pred_check_branch
        %1236 = sbr.rel (%p1234) target = $region56
      $region55: #{text_classification_forward.1} parent=43 // pred_region
        %s1237 = smul.u32 2, %s21
      $region56: #{text_classification_forward.1} parent=43 // pred_fallthru
        _
      // Predicated region
      $region57: #{text_classification_forward.1} parent=43 // pred_check
        %p1238 = pneg %p188
      $region58: #{text_classification_forward.1} parent=43 // pred_check_branch
        %1240 = sbr.rel (%p1238) target = $region60
      $region59: #{text_classification_forward.1} parent=43 // pred_region
        %s1241 = smul.u32 2, %s21
        %p1242 = scmp.lt.s32.totalorder %s1241, 1
        %s1243 = scalar_select %p1242, %s1241, 1
        %s1244 = smul.addr %s1243, 8
        %s1245 = scalar_lea.vmem %s6, %s1244
      $region60: #{text_classification_forward.1} parent=43 // pred_fallthru
        _
    $region44: #{text_classification_forward.1} parent=5 // pred_fallthru
      _
    %p1246 = scmp.le.s32.totalorder 2, %s12
    // Predicated region
    $region61: #{text_classification_forward.1} parent=5 // pred_check
      %p1247 = pneg %p1246
    $region62: #{text_classification_forward.1} parent=5 // pred_check_branch
      %1249 = sbr.rel (%p1247) target = $region64
    $region63: #{text_classification_forward.1} parent=5 // pred_region
      %s1250 = ssub.s32 %s12, 2
    $region64: #{text_classification_forward.1} parent=5 // pred_fallthru
      _
  $region6: #{text_classification_forward.1} parent=0 // loop_footer
    %s16 = sadd.s32 1, %s12
  $region7: #{text_classification_forward.1} parent=0 // loop_footer_branch
    %11 = sbr.rel target = $region3
  $region8: #{text_classification_forward.1} parent=0 // loop_exit
    _

</llo_original>
